<compile_context>
chip_gen: v7x
topology: tpu7x:2x2x1
jax: 0.10.0
libtpu: 0.0.40
codegen_flags: <defaults>
</compile_context>

<pallas_src>
import functools

import jax
import jax.numpy as jnp
from jax.experimental import pallas as pl
from jax.experimental.pallas import tpu as pltpu


def _round_up(x, m):
    return ((x + m - 1) // m) * m


def _pad_full_plane_kernel(x_ref, o_ref, *, h, w, fill):
    # 1) Whole-block fill: lane-dense, unmasked full-width stores (the output
    #    block's last two dims are the full (h_out, w_out)).
    o_ref[...] = jnp.full(o_ref.shape, fill, dtype=o_ref.dtype)
    # 2) Overwrite the top-left interior with the image.  Starts at sublane /
    #    lane offset 0; the redundant re-write of the interior is VMEM-only
    #    VPU/vst work that stays hidden under the HBM DMA (op is HBM-bound).
    o_ref[:, :h, :w] = x_ref[...]


def _pad_row_tiled_kernel(x_ref, o_ref, *, h, w, th, fill):
    # Row-tiled fallback for planes too large to double-buffer whole.
    # Output row-tile j covers output rows [j*th, (j+1)*th); input blocks are
    # clamped in the index_map, so rows past h are masked to `fill` here.
    j = pl.program_id(1)
    row0 = j * th
    rows = row0 + jax.lax.broadcasted_iota(jnp.int32, (1, th, w), 1)
    in_image = rows < h
    fill_s = jnp.asarray(fill, dtype=o_ref.dtype)
    # Whole-block lane-dense fill first, then the (masked) interior columns.
    o_ref[...] = jnp.full(o_ref.shape, fill, dtype=o_ref.dtype)
    o_ref[:, :, :w] = jnp.where(in_image, x_ref[...], fill_s)


def pad_to_size(img, spatial_size, fill=0, padding_mode="constant",
                _force_block_budget_bytes=None):
    """JAX/Pallas equivalent of PadToSize.forward for NCHW tensors."""
    if padding_mode != "constant":
        # TODO(synk): only 'constant' padding_mode is implemented (module default).
        raise NotImplementedError("only constant padding supported")

    if isinstance(spatial_size, int):
        spatial_size = (spatial_size, spatial_size)

    n, c, h, w = img.shape
    pad_h = max(0, spatial_size[0] - h)
    pad_w = max(0, spatial_size[1] - w)
    padding = jnp.array([0, 0, pad_w, pad_h], dtype=jnp.int32)

    if pad_h == 0 and pad_w == 0:
        return img, padding

    h_out, w_out = h + pad_h, w + pad_w
    nc = n * c
    x = img.reshape(nc, h, w)

    itemsize = jnp.dtype(img.dtype).itemsize
    # Plain (numpy) scalar, not a captured device array.
    fill_val = jnp.dtype(img.dtype).type(fill)

    # --- Generation-aware VMEM budgeting ------------------------------------
    # v5e/v6e: 128 MiB VMEM, v7x: 64 MiB per TensorCore.  One (in+out) block is
    # budgeted to ~20% of physical VMEM; with double buffering that's ~40% in
    # flight, leaving headroom for compiler scratch on every generation.
    try:
        vmem_cap = int(pltpu.get_tpu_info().vmem_capacity_bytes)
    except Exception:  # pragma: no cover - e.g. interpret mode
        vmem_cap = 64 * 1024 * 1024  # conservative (v7x per-TC)
    block_budget = vmem_cap // 5
    if _force_block_budget_bytes is not None:  # test hook for the fallback path
        block_budget = int(_force_block_budget_bytes)

    in_plane = h * w * itemsize
    out_plane = h_out * w_out * itemsize
    plane_bytes = in_plane + out_plane
    total_bytes = nc * plane_bytes

    if plane_bytes <= block_budget:
        # --- Path A: whole (h,w)->(h_out,w_out) planes, BC planes per block --
        # Keep >= 4 grid steps when nc allows: enables software pipelining and
        # gives the "parallel" axis enough steps to cover both v7x TensorCores.
        min_steps = 4
        bc = max(1, min(nc, block_budget // plane_bytes, -(-nc // min_steps)))
        grid = (pl.cdiv(nc, bc),)
        block_bytes = bc * plane_bytes
        kernel = functools.partial(_pad_full_plane_kernel, h=h, w=w, fill=fill_val)
        in_specs = [pl.BlockSpec((bc, h, w), lambda i: (i, 0, 0))]
        out_specs = pl.BlockSpec((bc, h_out, w_out), lambda i: (i, 0, 0))
        dim_sem = ("parallel",)
    else:
        # --- Path B: row-tiled fallback for very large planes ---------------
        # Row tile is a multiple of the sublane pack factor (8 f32 / 16 bf16 /
        # 32 int8) so the block shapes satisfy the (8,128) tiling constraint.
        row_pack = 8 * max(1, 4 // itemsize)
        per_row = (w + w_out) * itemsize
        th = max(row_pack, (block_budget // max(1, per_row)) // row_pack * row_pack)
        th = min(th, _round_up(h_out, row_pack))
        nrow = pl.cdiv(h_out, th)
        max_in_blk = max(0, -(-h // th) - 1)  # last valid input row-block index
        grid = (nc, nrow)
        block_bytes = th * per_row
        kernel = functools.partial(_pad_row_tiled_kernel, h=h, w=w, th=th,
                                   fill=fill_val)
        # Input block index is clamped; tiles entirely in the pad region reuse
        # the previous block index, so Pallas skips the redundant re-fetch.
        in_specs = [pl.BlockSpec(
            (1, th, w), lambda i, j: (i, jnp.minimum(j, max_in_blk), 0))]
        out_specs = pl.BlockSpec((1, th, w_out), lambda i, j: (i, j, 0))
        dim_sem = ("parallel", "arbitrary")

    # Enough scoped VMEM for the ~2x double-buffered (in+out) block plus
    # headroom, never exceeding ~90% of physical VMEM.
    vmem_limit = min(int(vmem_cap * 0.9),
                     max(int(vmem_cap * 0.6), 2 * block_bytes + (4 << 20)))

    out = pl.pallas_call(
        kernel,
        out_shape=jax.ShapeDtypeStruct((nc, h_out, w_out), img.dtype),
        grid_spec=pltpu.PrefetchScalarGridSpec(
            num_scalar_prefetch=0,
            grid=grid,
            in_specs=in_specs,
            out_specs=out_specs,
        ),
        compiler_params=pltpu.CompilerParams(
            dimension_semantics=dim_sem,
            vmem_limit_bytes=vmem_limit,
        ),
        cost_estimate=pl.CostEstimate(
            flops=0, transcendentals=0, bytes_accessed=int(total_bytes)),
    )(x)

    out = out.reshape(n, c, h_out, w_out)
    return out, padding


def _reference(img, spatial_size, fill=0):
    h, w = img.shape[-2:]
    pad_h = max(0, spatial_size[0] - h)
    pad_w = max(0, spatial_size[1] - w)
    return jnp.pad(
        img,
        ((0, 0), (0, 0), (0, pad_h), (0, pad_w)),
        mode="constant",
        constant_values=fill,
    )


if __name__ == "__main__":
    key = jax.random.PRNGKey(0)
    x = jax.random.normal(key, (2, 4, 16, 16), dtype=jnp.float32)

    # Case 1: pad both H (16->24) and W (16->32), zero fill.  nc=8 -> bc=2,
    # grid=(4,) so the pipeline (and v7x's two TCs) actually have work.
    out, padding = pad_to_size(x, (24, 32), fill=0.0)
    out = jax.block_until_ready(out)
    ref = _reference(x, (24, 32), fill=0.0)
    assert out.shape == (2, 4, 24, 32), out.shape
    assert out.dtype == x.dtype
    assert jnp.array_equal(out, ref), "mismatch vs reference pad (case 1)"
    assert jnp.array_equal(padding, jnp.array([0, 0, 16, 8], dtype=jnp.int32))

    # Case 2: pad only W, non-zero fill (exercises the h_out == h branch).
    out2, padding2 = pad_to_size(x, (16, 40), fill=1.5)
    out2 = jax.block_until_ready(out2)
    ref2 = _reference(x, (16, 40), fill=1.5)
    assert out2.shape == (2, 4, 16, 40), out2.shape
    assert jnp.array_equal(out2, ref2), "mismatch vs reference pad (case 2)"
    assert jnp.array_equal(padding2, jnp.array([0, 0, 24, 0], dtype=jnp.int32))

    # Case 3: no padding needed -> identity early return.
    out3, padding3 = pad_to_size(x, (16, 16), fill=0.0)
    assert jnp.array_equal(out3, x)
    assert jnp.array_equal(padding3, jnp.array([0, 0, 0, 0], dtype=jnp.int32))

    # Case 4: force the row-tiled fallback (as if a plane exceeded the VMEM
    # budget), including a row tile that straddles the image/pad boundary.
    y = jax.random.normal(jax.random.PRNGKey(0), (1, 2, 12, 16), dtype=jnp.float32)
    out4, padding4 = pad_to_size(y, (24, 40), fill=-2.0,
                                 _force_block_budget_bytes=2048)
    out4 = jax.block_until_ready(out4)
    ref4 = _reference(y, (24, 40), fill=-2.0)
    assert out4.shape == (1, 2, 24, 40), out4.shape
    assert jnp.array_equal(out4, ref4), "mismatch vs reference pad (case 4)"
    assert jnp.array_equal(padding4, jnp.array([0, 0, 24, 12], dtype=jnp.int32))

    print("KERNEL_OK")
</pallas_src>

<mosaic_0001>
module attributes {stable_mosaic.version = 11 : i64} {
  func.func @_pad_full_plane_kernel(%arg0: i32, %arg1: memref<2x16x16xf32, #tpu.memory_space<vmem>>, %arg2: memref<2x24x32xf32, #tpu.memory_space<vmem>>) attributes {dimension_semantics = [#tpu.dimension_semantics<parallel>], iteration_bounds = array<i64: 4>, scalar_prefetch = 0 : i64, scratch_operands = 0 : i64, tpu.core_type = #tpu.core_type<tc>, window_params = [{transform_indices = @transform_0, window_bounds = array<i64: 2, 16, 16>}, {transform_indices = @transform_1, window_bounds = array<i64: 2, 24, 32>}]} {
    %cst = arith.constant 0.000000e+00 : f32
    %0 = vector.broadcast %cst : f32 to vector<2x24x32xf32>
    %c0 = arith.constant 0 : index
    %c0_0 = arith.constant 0 : index
    %c0_1 = arith.constant 0 : index
    %1 = vector.load %arg2[%c0, %c0_0, %c0_1] : memref<2x24x32xf32, #tpu.memory_space<vmem>>, vector<2x24x32xf32>
    tpu.vector_store %arg2[%c0, %c0_0, %c0_1], %0 {strides = array<i32>} : memref<2x24x32xf32, #tpu.memory_space<vmem>>, vector<2x24x32xf32>,
    %c0_2 = arith.constant 0 : index
    %c0_3 = arith.constant 0 : index
    %c0_4 = arith.constant 0 : index
    %2 = vector.load %arg1[%c0_2, %c0_3, %c0_4] : memref<2x16x16xf32, #tpu.memory_space<vmem>>, vector<2x16x16xf32>
    %c0_5 = arith.constant 0 : index
    %c0_6 = arith.constant 0 : index
    %c0_7 = arith.constant 0 : index
    %3 = vector.load %arg2[%c0_5, %c0_6, %c0_7] : memref<2x24x32xf32, #tpu.memory_space<vmem>>, vector<2x16x16xf32>
    tpu.vector_store %arg2[%c0_5, %c0_6, %c0_7], %2 {strides = array<i32>} : memref<2x24x32xf32, #tpu.memory_space<vmem>>, vector<2x16x16xf32>,
    return
  }
  func.func @transform_0(%arg0: i32) -> (i32, i32, i32) {
    %c0_i32 = arith.constant 0 : i32
    %c0_i32_0 = arith.constant 0 : i32
    %c0_i32_1 = arith.constant 0 : i32
    return %arg0, %c0_i32, %c0_i32_0 : i32, i32, i32
  }
  func.func @transform_1(%arg0: i32) -> (i32, i32, i32) {
    %c0_i32 = arith.constant 0 : i32
    %c0_i32_0 = arith.constant 0 : i32
    %c0_i32_1 = arith.constant 0 : i32
    return %arg0, %c0_i32, %c0_i32_0 : i32, i32, i32
  }
}

</mosaic_0001>

<llo_original>
// kernel: tpu_custom_call.1
$region0: #{tpu_custom_call.1}
  #allocation0 [shape = 'u32[]', space=smem, size = 0x4, offset = 0x4, fixed_abs, tag = 'smem constant byte address 0x4 - core index']
  #allocation1 [shape = 'u32[144,128]{1,0:T(1,128)}', space=vmem, size = 0x12000, scoped, tag = 'internal scratch']
  %s0 = inlined_call_operand.hbm [shape: f32[8,16,16], index: 0, kind: input, shape index: {}]
  %s1 = inlined_call_operand.hbm [shape: f32[8,24,32], index: 1, kind: output, shape index: {}]
  %s2 = sld [smem:[#allocation0]]
  $region41: #{tpu_custom_call.1} parent=0
    _
  %s4 = ssub.s32 1, %s2
  %s5 = scalar_select 0, %s4, %s2
  $region1: #{tpu_custom_call.1} parent=0
    #allocation2 [shape = 'u8[32768]{0}', space=vmem, size = 0x8000, scoped, tag = 'input window, operand 0']
    #allocation3 [shape = 's32[2]{0}', space=sflag, size = 0x8, scoped, tag = 'scoped memory for tpu_custom_call.1']
    #allocation4 [shape = 's32[2]{0}', space=sflag, size = 0x8, scoped, tag = 'scoped memory for tpu_custom_call.1']
    #allocation5 [shape = 'u8[49152]{0}', space=vmem, size = 0xc000, scoped, tag = 'output window, operand 0']
    %6 = vsyncpa [#allocation3], 0
    %s7 = scalar_lea.sflag [#allocation3], 1
    %8 = vsyncpa %s7, 0
    %9 = vsyncpa [#allocation4], 0
    %s10 = scalar_lea.sflag [#allocation4], 1
    %11 = vsyncpa %s10, 0
    loop: start=0, step=1, limit=6
    $region2: #{tpu_custom_call.1} parent=1 // loop_pre_header
      _
    $region3: #{tpu_custom_call.1} parent=1 // loop_header
      %s13 = sphi 0, %s17
      %p14 = scmp.ge.s32.totalorder %s13, 6
      %s23 = sphi 0, %s25
      %s26 = sphi 0, %s23
      %s27 = sphi 0, %s26
      %s43 = sphi 0, %s27
      %s49 = sphi 0, %s51
      %s52 = sphi 0, %s49
      %s53 = sphi 0, %s52
      %s69 = sphi 0, %s53
    $region4: #{tpu_custom_call.1} parent=1 // loop_header_branch
      %16 = sbr.rel (%p14) target = $region8
    $region5: #{tpu_custom_call.1} parent=1 // loop_body
      %s18 = ssub.s32 %s13, 1
      %s19 = ssub.s32 %s13, 2
      %s20 = sadd.s32 %s13, 1
      %s21 = ssub.s32 %s13, %s20
      %p22 = scmp.eq.s32.totalorder %s21, 0
      %s24 = sadd.s32 %s23, 1
      %s25 = scalar_select %p22, %s23, %s24
      %p28 = pneg %p22
      %p29 = scmp.eq.s32.totalorder %s13, 3
      %p30 = por %p28, %p29
      %p31 = scmp.ne.s32.totalorder %s23, %s26
      %p32 = scmp.eq.s32.totalorder %s13, 0
      %p33 = por %p31, %p32
      %p34 = scmp.ne.s32.totalorder %s23, %s26
      %p35 = scmp.eq.s32.totalorder %s18, 3
      %p36 = por %p34, %p35
      %p37 = scmp.ne.s32.totalorder %s26, %s27
      %p38 = scmp.eq.s32.totalorder %s18, 0
      %p39 = por %p37, %p38
      %p40 = scmp.ne.s32.totalorder %s26, %s27
      %p41 = scmp.eq.s32.totalorder %s19, 3
      %p42 = por %p40, %p41
      %p44 = scmp.ne.s32.totalorder %s27, %s43
      %p45 = scmp.eq.s32.totalorder %s19, 0
      %p46 = por %p44, %p45
      %s47 = ssub.s32 %s13, %s20
      %p48 = scmp.eq.s32.totalorder %s47, 0
      %s50 = sadd.s32 %s49, 1
      %s51 = scalar_select %p48, %s49, %s50
      %p54 = pneg %p48
      %p55 = scmp.eq.s32.totalorder %s13, 3
      %p56 = por %p54, %p55
      %p57 = scmp.ne.s32.totalorder %s49, %s52
      %p58 = scmp.eq.s32.totalorder %s13, 0
      %p59 = por %p57, %p58
      %p60 = scmp.ne.s32.totalorder %s49, %s52
      %p61 = scmp.eq.s32.totalorder %s18, 3
      %p62 = por %p60, %p61
      %p63 = scmp.ne.s32.totalorder %s52, %s53
      %p64 = scmp.eq.s32.totalorder %s18, 0
      %p65 = por %p63, %p64
      %p66 = scmp.ne.s32.totalorder %s52, %s53
      %p67 = scmp.eq.s32.totalorder %s19, 3
      %p68 = por %p66, %p67
      %p70 = scmp.ne.s32.totalorder %s53, %s69
      %p71 = scmp.eq.s32.totalorder %s19, 0
      %p72 = por %p70, %p71
      %p73 = scmp.le.s32.totalorder 1, %s13
      %p74 = scmp.lt.s32.totalorder %s13, 5
      %p75 = pnand %p73, %p74
      %p76 = pneg %p75
      // Predicated region
      $region9: #{tpu_custom_call.1} parent=5 // pred_check
        _
      $region10: #{tpu_custom_call.1} parent=5 // pred_check_branch
        %78 = sbr.rel (%p75) target = $region12
      $region11: #{tpu_custom_call.1} parent=5 // pred_region
        %s79 = ssub.s32 %s13, 1
      $region12: #{tpu_custom_call.1} parent=5 // pred_fallthru
        _
      %p80 = scmp.lt.s32.totalorder %s13, 4
      // Predicated region
      $region13: #{tpu_custom_call.1} parent=5 // pred_check
        %p81 = pneg %p80
      $region14: #{tpu_custom_call.1} parent=5 // pred_check_branch
        %83 = sbr.rel (%p81) target = $region16
      $region15: #{tpu_custom_call.1} parent=5 // pred_region
        // Predicated region
        $region17: #{tpu_custom_call.1} parent=15 // pred_check
          %p84 = pneg %p33
        $region18: #{tpu_custom_call.1} parent=15 // pred_check_branch
          %86 = sbr.rel (%p84) target = $region20
        $region19: #{tpu_custom_call.1} parent=15 // pred_region
          %s87 = sand.u32 %s23, 1
          %s88 = scalar_lea.sflag [#allocation3], %s87
          %s89 = sand.u32 %s23, 1
          %s90 = smul.addr %s89, 32
          %s91 = scalar_lea.vmem [#allocation2], %s90
          %s92 = smul.u32 2, %s13
          %s94 = ssub.s32 512, 512
          %95 = vsyncadd %s88, %s94
          %s96 = smul.addr %s92, 2
          %s97 = smul.addr %s96, 128
          %s98 = scalar_lea.hbm %s0, %s97
          %s99 = sshll.u32 %s91, 4
          %s100 = int_to_ptr.vmem [resolvable:$true] %s99
          %105 = dma.hbm_to_vmem [thread:$0]  %s98, 512, %s100, %s88, 128, 128, 8
        $region20: #{tpu_custom_call.1} parent=15 // pred_fallthru
          _
      $region16: #{tpu_custom_call.1} parent=5 // pred_fallthru
        _
      %p106 = scmp.le.s32.totalorder 1, %s13
      %p107 = scmp.lt.s32.totalorder %s13, 5
      %p108 = pnand %p106, %p107
      %p109 = pneg %p108
      // Predicated region
      $region21: #{tpu_custom_call.1} parent=5 // pred_check
        _
      $region22: #{tpu_custom_call.1} parent=5 // pred_check_branch
        %111 = sbr.rel (%p108) target = $region24
      $region23: #{tpu_custom_call.1} parent=5 // pred_region
        %s112 = ssub.s32 %s13, 1
        %s113 = sand.u32 %s26, 1
        %s114 = scalar_lea.sflag [#allocation3], %s113
        %s115 = sand.u32 %s26, 1
        %s116 = smul.addr %s115, 32
        %s117 = scalar_lea.vmem [#allocation2], %s116
        // Predicated region
        $region25: #{tpu_custom_call.1} parent=23 // pred_check
          %p118 = pneg %p39
        $region26: #{tpu_custom_call.1} parent=23 // pred_check_branch
          %120 = sbr.rel (%p118) target = $region28
        $region27: #{tpu_custom_call.1} parent=23 // pred_region
          %121 = dma.done %s114, 512
        $region28: #{tpu_custom_call.1} parent=23 // pred_fallthru
          _
        %s122 = sand.u32 %s26, 1
        %s123 = scalar_lea.sflag [#allocation3], %s122
        %s124 = sand.u32 %s26, 1
        %s125 = smul.addr %s124, 32
        %s126 = scalar_lea.vmem [#allocation2], %s125
        %p127 = pneg %p39
        %p128 = pneg %p36
        %p129 = pneg %p65
        %p130 = pneg %p62
        %s131 = sand.u32 %s52, 1
        %s132 = scalar_lea.sflag [#allocation4], %s131
        %s133 = sand.u32 %s52, 1
        %s134 = smul.addr %s133, 48
        %s135 = scalar_lea.vmem [#allocation5], %s134
        %s136 = smul.u32 2, %s18
        %s137 = smul.u32 2, %s18
        %vm138 = vcmask 261120
        %139 = vst.msk [vmem:[%s135] sm:$0xff] %vm138, 0.0
        %140 = vst.msk [vmem:[%s135 + $0x8] sm:$0xff] %vm138, 0.0
        %141 = vst.msk [vmem:[%s135 + $0x10] sm:$0xff] %vm138, 0.0
        %142 = vst.msk [vmem:[%s135 + $0x18] sm:$0xff] %vm138, 0.0
        %143 = vst.msk [vmem:[%s135 + $0x20] sm:$0xff] %vm138, 0.0
        %144 = vst.msk [vmem:[%s135 + $0x28] sm:$0xff] %vm138, 0.0
        %v145 = vld [vmem:[%s117] sm:$0xff]
        %v146 = vld [vmem:[%s117 + $0x8] sm:$0xff]
        %v147 = vld [vmem:[%s117 + $0x10] sm:$0xff]
        %v148 = vld [vmem:[%s117 + $0x18] sm:$0xff]
        %vm149 = vcmask 130048
        %150 = vst.msk [vmem:[%s135] sm:$0xff] %vm149, %v145
        %151 = vst.msk [vmem:[%s135 + $0x8] sm:$0xff] %vm149, %v146
        %152 = vst.msk [vmem:[%s135 + $0x18] sm:$0xff] %vm149, %v147
        %153 = vst.msk [vmem:[%s135 + $0x20] sm:$0xff] %vm149, %v148
        %s154 = sand.u32 %s52, 1
        %s155 = scalar_lea.sflag [#allocation4], %s154
        %s156 = sand.u32 %s52, 1
        %s157 = smul.addr %s156, 48
        %s158 = scalar_lea.vmem [#allocation5], %s157
        // Predicated region
        $region29: #{tpu_custom_call.1} parent=23 // pred_check
          %p159 = pneg %p62
        $region30: #{tpu_custom_call.1} parent=23 // pred_check_branch
          %161 = sbr.rel (%p159) target = $region32
        $region31: #{tpu_custom_call.1} parent=23 // pred_region
          %s162 = smul.u32 2, %s18
          %s164 = ssub.s32 768, 768
          %165 = vsyncadd %s155, %s164
          %s166 = smul.addr %s162, 3
          %s167 = smul.addr %s166, 128
          %s168 = scalar_lea.hbm %s1, %s167
          %s169 = sshll.u32 %s158, 4
          %s170 = int_to_ptr.vmem [resolvable:$true] %s169
          %175 = dma.vmem_to_hbm [thread:$0]  %s170, 768, %s168, %s155, 128, 128, 8
        $region32: #{tpu_custom_call.1} parent=23 // pred_fallthru
          _
      $region24: #{tpu_custom_call.1} parent=5 // pred_fallthru
        _
      %p176 = scmp.le.s32.totalorder 2, %s13
      // Predicated region
      $region33: #{tpu_custom_call.1} parent=5 // pred_check
        %p177 = pneg %p176
      $region34: #{tpu_custom_call.1} parent=5 // pred_check_branch
        %179 = sbr.rel (%p177) target = $region36
      $region35: #{tpu_custom_call.1} parent=5 // pred_region
        %s180 = ssub.s32 %s13, 2
        // Predicated region
        $region37: #{tpu_custom_call.1} parent=35 // pred_check
          %p181 = pneg %p68
        $region38: #{tpu_custom_call.1} parent=35 // pred_check_branch
          %183 = sbr.rel (%p181) target = $region40
        $region39: #{tpu_custom_call.1} parent=35 // pred_region
          %s184 = sand.u32 %s53, 1
          %s185 = scalar_lea.sflag [#allocation4], %s184
          %s186 = sand.u32 %s53, 1
          %s187 = smul.addr %s186, 48
          %s188 = scalar_lea.vmem [#allocation5], %s187
          %189 = dma.done %s185, 768
        $region40: #{tpu_custom_call.1} parent=35 // pred_fallthru
          _
      $region36: #{tpu_custom_call.1} parent=5 // pred_fallthru
        _
    $region6: #{tpu_custom_call.1} parent=1 // loop_footer
      %s17 = sadd.s32 1, %s13
    $region7: #{tpu_custom_call.1} parent=1 // loop_footer_branch
      %12 = sbr.rel target = $region3
    $region8: #{tpu_custom_call.1} parent=1 // loop_exit
      _
    %190 = vsyncpa [#allocation3], 1
    %s191 = scalar_lea.sflag [#allocation3], 1
    %192 = vsyncpa %s191, 1
    %193 = vsyncpa [#allocation4], 1
    %s194 = scalar_lea.sflag [#allocation4], 1
    %195 = vsyncpa %s194, 1

</llo_original>
